<compile_context>
chip_gen: v5e
topology: v5e:2x2
jax: 0.10.0
libtpu: 0.0.40
codegen_flags: <defaults>
</compile_context>

<pallas_src>
import jax
import jax.numpy as jnp
from jax import lax
from jax.experimental import pallas as pl
from jax.experimental.pallas import tpu as pltpu

BN_EPS = 1e-5


def _stats_kernel(x_ref, sum_ref, gram_ref):
    """Accumulate per-channel sum and the Cin x Cin Gram of x over all pixels."""
    first = jnp.logical_and(pl.program_id(0) == 0, pl.program_id(1) == 0)

    @pl.when(first)
    def _():
        sum_ref[...] = jnp.zeros_like(sum_ref)
        gram_ref[...] = jnp.zeros_like(gram_ref)

    x = x_ref[...]  # (Cin, T): pixels on the lane axis
    sum_ref[...] += jnp.sum(x, axis=1, keepdims=True)                 # (Cin, 1)
    gram_ref[...] += lax.dot_general(                                 # x @ x.T
        x, x, (((1,), (1,)), ((), ())), preferred_element_type=jnp.float32)


def _conv_bn_relu_kernel(x_ref, w_ref, b_ref, o_ref):
    """Streaming fused pass: out = relu(W' @ x + b'), written straight in NCHW."""
    y = jnp.dot(w_ref[...], x_ref[...], preferred_element_type=jnp.float32)
    y = y + b_ref[...]                          # (Cout, 1) broadcast over lanes
    o_ref[...] = jnp.maximum(y, 0.0).astype(o_ref.dtype)


def _pick_tile(hw_pad):
    # hw_pad is a multiple of 128, so this always returns >= 128.
    for t in (2048, 1024, 512, 256, 128):
        if hw_pad % t == 0:
            return t
    return hw_pad


def conv1x1_bn_relu(x_nchw, weight, bias, gamma, beta):
    """Forward of Conv1x1: Conv2d(k=1) + BatchNorm2d (train stats) + ReLU.

    Args:
      x_nchw: (N, Cin, H, W) float32
      weight: (Cout, Cin, 1, 1) float32  (PyTorch Conv2d weight layout)
      bias:   (Cout,) float32
      gamma:  (Cout,) float32  (BatchNorm weight)
      beta:   (Cout,) float32  (BatchNorm bias)
    Returns:
      (N, Cout, H, W) float32
    """
    N, Cin, H, W = x_nchw.shape
    Cout = weight.shape[0]
    HW = H * W
    P = N * HW

    f32 = jnp.float32
    x_flat = x_nchw.reshape(N, Cin, HW).astype(f32)   # free reshape, stays NCHW

    # Pad the pixel (lane) axis to a multiple of 128.  Zero padding is exact
    # for the stats pass (zeros add nothing to sum / Gram; divisor is real P).
    HWp = ((HW + 127) // 128) * 128
    if HWp != HW:
        x_flat = jnp.pad(x_flat, ((0, 0), (0, 0), (0, HWp - HW)))

    T = _pick_tile(HWp)
    grid = (N, HWp // T)

    # ---------------- pass 1: per-channel sum(x) and Gram X @ X^T -----------
    sum_x, gram_x = pl.pallas_call(
        _stats_kernel,
        out_shape=(jax.ShapeDtypeStruct((Cin, 1), f32),
                   jax.ShapeDtypeStruct((Cin, Cin), f32)),
        grid=grid,
        in_specs=[pl.BlockSpec((None, Cin, T), lambda n, t: (n, 0, t))],
        out_specs=(pl.BlockSpec((Cin, 1), lambda n, t: (0, 0)),
                   pl.BlockSpec((Cin, Cin), lambda n, t: (0, 0))),
        compiler_params=pltpu.CompilerParams(
            dimension_semantics=("arbitrary", "arbitrary")),
    )(x_flat)

    # ------- fold BatchNorm (training stats) + conv into W', b' (tiny) ------
    w_mat = weight.reshape(Cout, Cin).astype(f32)            # (Cout, Cin)
    bias_c = bias.astype(f32)[:, None]                       # (Cout, 1)
    mean_x = sum_x / P                                       # (Cin, 1)
    cov_x = gram_x / P - mean_x @ mean_x.T                   # (Cin, Cin)
    mean_y = w_mat @ mean_x + bias_c                         # (Cout, 1)
    var_y = jnp.sum((w_mat @ cov_x) * w_mat, axis=1, keepdims=True)
    var_y = jnp.maximum(var_y, 0.0)                          # guard fp cancellation
    scale = gamma.astype(f32)[:, None] * lax.rsqrt(var_y + BN_EPS)
    w_fold = scale * w_mat                                   # (Cout, Cin)
    b_fold = beta.astype(f32)[:, None] + scale * (bias_c - mean_y)  # (Cout, 1)

    # -------- pass 2: streaming matmul + affine + ReLU, NCHW output ---------
    out_flat = pl.pallas_call(
        _conv_bn_relu_kernel,
        out_shape=jax.ShapeDtypeStruct((N, Cout, HWp), x_nchw.dtype),
        grid=grid,
        in_specs=[pl.BlockSpec((None, Cin, T), lambda n, t: (n, 0, t)),
                  pl.BlockSpec((Cout, Cin), lambda n, t: (0, 0)),
                  pl.BlockSpec((Cout, 1), lambda n, t: (0, 0))],
        out_specs=pl.BlockSpec((None, Cout, T), lambda n, t: (n, 0, t)),
        compiler_params=pltpu.CompilerParams(
            dimension_semantics=("parallel", "parallel")),
    )(x_flat, w_fold, b_fold)

    if HWp != HW:
        out_flat = out_flat[:, :, :HW]
    return out_flat.reshape(N, Cout, H, W)


if __name__ == "__main__":
    # Deterministic synthetic parameters (Conv1x1(inplanes=4, planes=8)).
    key = jax.random.PRNGKey(0)
    k_x, k_w, k_b, k_g, k_be = jax.random.split(key, 5)

    N, Cin, H, W = 2, 4, 16, 16
    Cout = 8

    x = jax.random.normal(k_x, (N, Cin, H, W), dtype=jnp.float32)
    weight = jax.random.normal(k_w, (Cout, Cin, 1, 1), dtype=jnp.float32) * 0.1
    bias = jax.random.normal(k_b, (Cout,), dtype=jnp.float32) * 0.1
    gamma = 1.0 + 0.1 * jax.random.normal(k_g, (Cout,), dtype=jnp.float32)
    beta = 0.1 * jax.random.normal(k_be, (Cout,), dtype=jnp.float32)

    fwd = jax.jit(conv1x1_bn_relu)
    out = fwd(x, weight, bias, gamma, beta)
    jax.block_until_ready(out)

    # Pure-JAX reference of the same semantics (conv+bias, BN train stats, ReLU).
    y_ref = (jnp.einsum("nchw,oc->nohw", x, weight.reshape(Cout, Cin))
             + bias[None, :, None, None])
    mean = jnp.mean(y_ref, axis=(0, 2, 3), keepdims=True)
    var = jnp.mean((y_ref - mean) ** 2, axis=(0, 2, 3), keepdims=True)
    ref = jnp.maximum(
        (y_ref - mean) / jnp.sqrt(var + BN_EPS) * gamma[None, :, None, None]
        + beta[None, :, None, None],
        0.0,
    )
    assert out.shape == (N, Cout, H, W)
    assert jnp.allclose(out, ref, atol=1e-4, rtol=1e-4)

    # TODO(synk): BatchNorm running_mean/running_var (momentum) buffer updates
    # are a training side effect, not part of the forward output; omitted.
    print("KERNEL_OK")
</pallas_src>

<mosaic_0001>
module attributes {stable_mosaic.version = 11 : i64} {
  func.func @_stats_kernel(%arg0: i32, %arg1: i32, %arg2: memref<1x4x256xf32, #tpu.memory_space<vmem>>, %arg3: memref<4x1xf32, #tpu.memory_space<vmem>>, %arg4: memref<4x4xf32, #tpu.memory_space<vmem>>) attributes {dimension_semantics = [#tpu.dimension_semantics<arbitrary>, #tpu.dimension_semantics<arbitrary>], iteration_bounds = array<i64: 2, 1>, scalar_prefetch = 0 : i64, scratch_operands = 0 : i64, tpu.core_type = #tpu.core_type<tc>, window_params = [{transform_indices = @transform_0, window_bounds = array<i64: 1, 4, 256>}, {pipeline_mode = #tpu.pipeline_mode<synchronous>, transform_indices = @transform_1, window_bounds = array<i64: 4, 1>}, {pipeline_mode = #tpu.pipeline_mode<synchronous>, transform_indices = @transform_2, window_bounds = array<i64: 4, 4>}]} {
    %c0_i32 = arith.constant 0 : i32
    %0 = arith.cmpi eq, %arg0, %c0_i32 : i32
    %c0_i32_0 = arith.constant 0 : i32
    %1 = arith.cmpi eq, %arg1, %c0_i32_0 : i32
    %2 = arith.andi %0, %1 : i1
    %3 = arith.extui %2 : i1 to i32
    %c0_i32_1 = arith.constant 0 : i32
    %4 = arith.cmpi ne, %3, %c0_i32_1 : i32
    scf.if %4 {
      %cst_13 = arith.constant 0.000000e+00 : f32
      %16 = vector.broadcast %cst_13 : f32 to vector<4x1xf32>
      %c0_14 = arith.constant 0 : index
      %c0_15 = arith.constant 0 : index
      %17 = vector.load %arg3[%c0_14, %c0_15] : memref<4x1xf32, #tpu.memory_space<vmem>>, vector<4x1xf32>
      tpu.vector_store %arg3[%c0_14, %c0_15], %16 {strides = array<i32>} : memref<4x1xf32, #tpu.memory_space<vmem>>, vector<4x1xf32>,
      %cst_16 = arith.constant 0.000000e+00 : f32
      %18 = vector.broadcast %cst_16 : f32 to vector<4x4xf32>
      %c0_17 = arith.constant 0 : index
      %c0_18 = arith.constant 0 : index
      %19 = vector.load %arg4[%c0_17, %c0_18] : memref<4x4xf32, #tpu.memory_space<vmem>>, vector<4x4xf32>
      tpu.vector_store %arg4[%c0_17, %c0_18], %18 {strides = array<i32>} : memref<4x4xf32, #tpu.memory_space<vmem>>, vector<4x4xf32>,
    } else {
    }
    %c0 = arith.constant 0 : index
    %c0_2 = arith.constant 0 : index
    %c0_3 = arith.constant 0 : index
    %5 = vector.load %arg2[%c0, %c0_2, %c0_3] : memref<1x4x256xf32, #tpu.memory_space<vmem>>, vector<1x4x256xf32>
    %6 = vector.shape_cast %5 : vector<1x4x256xf32> to vector<4x256xf32>
    %c0_4 = arith.constant 0 : index
    %c0_5 = arith.constant 0 : index
    %7 = vector.load %arg3[%c0_4, %c0_5] : memref<4x1xf32, #tpu.memory_space<vmem>>, vector<4x1xf32>
    %cst = arith.constant dense<0.000000e+00> : vector<4xf32>
    %8 = vector.multi_reduction <add>, %6, %cst [1] : vector<4x256xf32> to vector<4xf32>
    %9 = vector.shape_cast %8 : vector<4xf32> to vector<4x1xf32>
    %10 = arith.addf %7, %9 : vector<4x1xf32>
    %c0_6 = arith.constant 0 : index
    %c0_7 = arith.constant 0 : index
    %11 = vector.load %arg3[%c0_6, %c0_7] : memref<4x1xf32, #tpu.memory_space<vmem>>, vector<4x1xf32>
    tpu.vector_store %arg3[%c0_6, %c0_7], %10 {strides = array<i32>} : memref<4x1xf32, #tpu.memory_space<vmem>>, vector<4x1xf32>,
    %c0_8 = arith.constant 0 : index
    %c0_9 = arith.constant 0 : index
    %12 = vector.load %arg4[%c0_8, %c0_9] : memref<4x4xf32, #tpu.memory_space<vmem>>, vector<4x4xf32>
    %cst_10 = arith.constant dense<0.000000e+00> : vector<4x4xf32>
    %13 = tpu.matmul %6, %6, %cst_10 {dimension_numbers = #tpu.dot_dimension_numbers<[1], [1], [0], [0], [0, 0, 1, 0], [], []>} : vector<4x256xf32>, vector<4x256xf32>, vector<4x4xf32> -> vector<4x4xf32>
    %14 = arith.addf %12, %13 : vector<4x4xf32>
    %c0_11 = arith.constant 0 : index
    %c0_12 = arith.constant 0 : index
    %15 = vector.load %arg4[%c0_11, %c0_12] : memref<4x4xf32, #tpu.memory_space<vmem>>, vector<4x4xf32>
    tpu.vector_store %arg4[%c0_11, %c0_12], %14 {strides = array<i32>} : memref<4x4xf32, #tpu.memory_space<vmem>>, vector<4x4xf32>,
    return
  }
  func.func @transform_0(%arg0: i32, %arg1: i32) -> (i32, i32, i32) {
    %c0_i32 = arith.constant 0 : i32
    %c0_i32_0 = arith.constant 0 : i32
    return %arg0, %c0_i32, %arg1 : i32, i32, i32
  }
  func.func @transform_1(%arg0: i32, %arg1: i32) -> (i32, i32) {
    %c0_i32 = arith.constant 0 : i32
    %c0_i32_0 = arith.constant 0 : i32
    %c0_i32_1 = arith.constant 0 : i32
    return %c0_i32, %c0_i32_0 : i32, i32
  }
  func.func @transform_2(%arg0: i32, %arg1: i32) -> (i32, i32) {
    %c0_i32 = arith.constant 0 : i32
    %c0_i32_0 = arith.constant 0 : i32
    %c0_i32_1 = arith.constant 0 : i32
    return %c0_i32, %c0_i32_0 : i32, i32
  }
}

module attributes {stable_mosaic.version = 11 : i64} {
  func.func @_conv_bn_relu_kernel(%arg0: i32, %arg1: i32, %arg2: memref<1x4x256xf32, #tpu.memory_space<vmem>>, %arg3: memref<8x4xf32, #tpu.memory_space<vmem>>, %arg4: memref<8x1xf32, #tpu.memory_space<vmem>>, %arg5: memref<1x8x256xf32, #tpu.memory_space<vmem>>) attributes {dimension_semantics = [#tpu.dimension_semantics<parallel>, #tpu.dimension_semantics<parallel>], iteration_bounds = array<i64: 2, 1>, scalar_prefetch = 0 : i64, scratch_operands = 0 : i64, tpu.core_type = #tpu.core_type<tc>, window_params = [{transform_indices = @transform_0, window_bounds = array<i64: 1, 4, 256>}, {pipeline_mode = #tpu.pipeline_mode<synchronous>, transform_indices = @transform_1, window_bounds = array<i64: 8, 4>}, {pipeline_mode = #tpu.pipeline_mode<synchronous>, transform_indices = @transform_2, window_bounds = array<i64: 8, 1>}, {transform_indices = @transform_3, window_bounds = array<i64: 1, 8, 256>}]} {
    %c0 = arith.constant 0 : index
    %c0_0 = arith.constant 0 : index
    %0 = vector.load %arg3[%c0, %c0_0] : memref<8x4xf32, #tpu.memory_space<vmem>>, vector<8x4xf32>
    %c0_1 = arith.constant 0 : index
    %c0_2 = arith.constant 0 : index
    %c0_3 = arith.constant 0 : index
    %1 = vector.load %arg2[%c0_1, %c0_2, %c0_3] : memref<1x4x256xf32, #tpu.memory_space<vmem>>, vector<1x4x256xf32>
    %2 = vector.shape_cast %1 : vector<1x4x256xf32> to vector<4x256xf32>
    %cst = arith.constant dense<0.000000e+00> : vector<8x256xf32>
    %3 = tpu.matmul %0, %2, %cst {dimension_numbers = #tpu.dot_dimension_numbers<[1], [0], [0], [1], [0, 0, 1, 1], [], []>} : vector<8x4xf32>, vector<4x256xf32>, vector<8x256xf32> -> vector<8x256xf32>
    %c0_4 = arith.constant 0 : index
    %c0_5 = arith.constant 0 : index
    %4 = vector.load %arg4[%c0_4, %c0_5] : memref<8x1xf32, #tpu.memory_space<vmem>>, vector<8x1xf32>
    %5 = vector.broadcast %4 : vector<8x1xf32> to vector<8x256xf32>
    %6 = arith.addf %3, %5 : vector<8x256xf32>
    %cst_6 = arith.constant 0.000000e+00 : f32
    %7 = vector.broadcast %cst_6 : f32 to vector<8x256xf32>
    %8 = arith.maximumf %6, %7 : vector<8x256xf32>
    %c0_7 = arith.constant 0 : index
    %c0_8 = arith.constant 0 : index
    %c0_9 = arith.constant 0 : index
    %9 = vector.load %arg5[%c0_7, %c0_8, %c0_9] : memref<1x8x256xf32, #tpu.memory_space<vmem>>, vector<1x8x256xf32>
    %10 = vector.shape_cast %9 : vector<1x8x256xf32> to vector<8x256xf32>
    %11 = vector.shape_cast %8 : vector<8x256xf32> to vector<1x8x256xf32>
    tpu.vector_store %arg5[%c0_7, %c0_8, %c0_9], %11 {strides = array<i32>} : memref<1x8x256xf32, #tpu.memory_space<vmem>>, vector<1x8x256xf32>,
    return
  }
  func.func @transform_0(%arg0: i32, %arg1: i32) -> (i32, i32, i32) {
    %c0_i32 = arith.constant 0 : i32
    %c0_i32_0 = arith.constant 0 : i32
    return %arg0, %c0_i32, %arg1 : i32, i32, i32
  }
  func.func @transform_1(%arg0: i32, %arg1: i32) -> (i32, i32) {
    %c0_i32 = arith.constant 0 : i32
    %c0_i32_0 = arith.constant 0 : i32
    %c0_i32_1 = arith.constant 0 : i32
    return %c0_i32, %c0_i32_0 : i32, i32
  }
  func.func @transform_2(%arg0: i32, %arg1: i32) -> (i32, i32) {
    %c0_i32 = arith.constant 0 : i32
    %c0_i32_0 = arith.constant 0 : i32
    %c0_i32_1 = arith.constant 0 : i32
    return %c0_i32, %c0_i32_0 : i32, i32
  }
  func.func @transform_3(%arg0: i32, %arg1: i32) -> (i32, i32, i32) {
    %c0_i32 = arith.constant 0 : i32
    %c0_i32_0 = arith.constant 0 : i32
    return %arg0, %c0_i32, %arg1 : i32, i32, i32
  }
}

</mosaic_0001>

<llo_original>
// kernel: conv1x1_bn_relu.2
$region0: #{conv1x1_bn_relu.2}
  #allocation0 [shape = 'u32[]', space=smem, size = 0x4, offset = 0x4, fixed_abs, tag = 'smem constant byte address 0x4 - core index']
  #allocation1 [shape = 'u32[72,128]{1,0:T(1,128)}', space=vmem, size = 0x9000, scoped, tag = 'internal scratch']
  %s0 = inlined_call_operand.vmem [shape: f32[2,4,256], index: 0, kind: input, shape index: {}]
  %s1 = inlined_call_operand.vmem [shape: f32[4,1], index: 1, kind: output, shape index: {0}]
  %s2 = inlined_call_operand.vmem [shape: f32[4,4], index: 2, kind: output, shape index: {1}]
  %3 = xla_tuple %s1, %s2
  %s4 = sld [smem:[#allocation0]]
  $region49: #{conv1x1_bn_relu.2} parent=0
    _
  %s6 = ssub.s32 1, %s4
  %s7 = scalar_select 0, %s6, %s4
  loop: start=0, step=1, limit=4
  $region2: #{conv1x1_bn_relu.2} parent=0 // loop_pre_header
    _
  $region3: #{conv1x1_bn_relu.2} parent=0 // loop_header
    %s9 = sphi 0, %s13
    %p10 = scmp.ge.s32.totalorder %s9, 4
    %s16 = sphi 0, %s28
    %s17 = sphi 0, %s24
    %s18 = sphi 0, %s16
    %s19 = sphi 0, %s17
    %s20 = sphi 0, %s18
    %s21 = sphi 0, %s19
    %s33 = sphi 0, %s35
    %s36 = sphi 0, %s33
    %s37 = sphi 0, %s36
    %s53 = sphi 0, %s37
    %s57 = sphi 0, %s57
    %s59 = sphi 0, %s57
    %s60 = sphi 0, %s59
    %s74 = sphi 0, %s60
    %s78 = sphi 0, %s78
    %s80 = sphi 0, %s78
    %s81 = sphi 0, %s80
    %s95 = sphi 0, %s81
  $region4: #{conv1x1_bn_relu.2} parent=0 // loop_header_branch
    %12 = sbr.rel (%p10) target = $region8
  $region5: #{conv1x1_bn_relu.2} parent=0 // loop_body
    %s14 = ssub.s32 %s9, 1
    %s15 = ssub.s32 %s9, 2
    %s22 = sadd.s32 1, %s17
    %p23 = scmp.ge.s32.totalorder %s22, 1
    %s24 = scalar_select %p23, 0, %s22
    %s25 = sadd.s32 1, %s16
    %s26 = scalar_select %p23, %s25, %s16
    %p27 = scmp.ge.s32.totalorder %s26, 2
    %s28 = scalar_select %p27, 0, %s26
    %s29 = ssub.s32 %s16, %s28
    %s30 = ssub.s32 %s17, %s24
    %s31 = sor.u32 %s29, %s30
    %p32 = scmp.eq.s32.totalorder %s31, 0
    %s34 = sadd.s32 %s33, 1
    %s35 = scalar_select %p32, %s33, %s34
    %p38 = pneg %p32
    %p39 = scmp.eq.s32.totalorder %s9, 1
    %p40 = por %p38, %p39
    %p41 = scmp.ne.s32.totalorder %s33, %s36
    %p42 = scmp.eq.s32.totalorder %s9, 0
    %p43 = por %p41, %p42
    %p44 = scmp.ne.s32.totalorder %s33, %s36
    %p45 = scmp.eq.s32.totalorder %s14, 1
    %p46 = por %p44, %p45
    %p47 = scmp.ne.s32.totalorder %s36, %s37
    %p48 = scmp.eq.s32.totalorder %s14, 0
    %p49 = por %p47, %p48
    %p50 = scmp.ne.s32.totalorder %s36, %s37
    %p51 = scmp.eq.s32.totalorder %s15, 1
    %p52 = por %p50, %p51
    %p54 = scmp.ne.s32.totalorder %s37, %s53
    %p55 = scmp.eq.s32.totalorder %s15, 0
    %p56 = por %p54, %p55
    %s58 = sadd.s32 %s57, 1
    %p61 = scmp.eq.s32.totalorder %s9, 1
    %p62 = scmp.ne.s32.totalorder %s57, %s59
    %p63 = scmp.eq.s32.totalorder %s9, 0
    %p64 = por %p62, %p63
    %p65 = scmp.ne.s32.totalorder %s57, %s59
    %p66 = scmp.eq.s32.totalorder %s14, 1
    %p67 = por %p65, %p66
    %p68 = scmp.ne.s32.totalorder %s59, %s60
    %p69 = scmp.eq.s32.totalorder %s14, 0
    %p70 = por %p68, %p69
    %p71 = scmp.ne.s32.totalorder %s59, %s60
    %p72 = scmp.eq.s32.totalorder %s15, 1
    %p73 = por %p71, %p72
    %p75 = scmp.ne.s32.totalorder %s60, %s74
    %p76 = scmp.eq.s32.totalorder %s15, 0
    %p77 = por %p75, %p76
    %s79 = sadd.s32 %s78, 1
    %p82 = scmp.eq.s32.totalorder %s9, 1
    %p83 = scmp.ne.s32.totalorder %s78, %s80
    %p84 = scmp.eq.s32.totalorder %s9, 0
    %p85 = por %p83, %p84
    %p86 = scmp.ne.s32.totalorder %s78, %s80
    %p87 = scmp.eq.s32.totalorder %s14, 1
    %p88 = por %p86, %p87
    %p89 = scmp.ne.s32.totalorder %s80, %s81
    %p90 = scmp.eq.s32.totalorder %s14, 0
    %p91 = por %p89, %p90
    %p92 = scmp.ne.s32.totalorder %s80, %s81
    %p93 = scmp.eq.s32.totalorder %s15, 1
    %p94 = por %p92, %p93
    %p96 = scmp.ne.s32.totalorder %s81, %s95
    %p97 = scmp.eq.s32.totalorder %s15, 0
    %p98 = por %p96, %p97
    %p99 = scmp.le.s32.totalorder 1, %s9
    %p100 = scmp.lt.s32.totalorder %s9, 3
    %p101 = pnand %p99, %p100
    %p102 = pneg %p101
    // Predicated region
    $region9: #{conv1x1_bn_relu.2} parent=5 // pred_check
      _
    $region10: #{conv1x1_bn_relu.2} parent=5 // pred_check_branch
      %104 = sbr.rel (%p101) target = $region12
    $region11: #{conv1x1_bn_relu.2} parent=5 // pred_region
      %s105 = ssub.s32 %s9, 1
    $region12: #{conv1x1_bn_relu.2} parent=5 // pred_fallthru
      _
    %p106 = scmp.lt.s32.totalorder %s9, 2
    // Predicated region
    $region13: #{conv1x1_bn_relu.2} parent=5 // pred_check
      %p107 = pneg %p106
    $region14: #{conv1x1_bn_relu.2} parent=5 // pred_check_branch
      %109 = sbr.rel (%p107) target = $region16
    $region15: #{conv1x1_bn_relu.2} parent=5 // pred_region
      // Predicated region
      $region17: #{conv1x1_bn_relu.2} parent=15 // pred_check
        %p110 = pneg %p43
      $region18: #{conv1x1_bn_relu.2} parent=15 // pred_check_branch
        %112 = sbr.rel (%p110) target = $region20
      $region19: #{conv1x1_bn_relu.2} parent=15 // pred_region
        %s113 = smul.u32 2, %s17
        %p114 = scmp.lt.s32.totalorder %s16, 1
        %s115 = scalar_select %p114, %s16, 1
        %p116 = scmp.lt.s32.totalorder %s113, 1
        %s117 = scalar_select %p116, %s113, 1
        %s118 = smul.addr %s115, 2
        %s119 = sadd.s32 %s117, %s118
        %s120 = smul.addr %s119, 4
        %s121 = scalar_lea.vmem %s0, %s120
        %s122 = smul.u32 2, %s17
      $region20: #{conv1x1_bn_relu.2} parent=15 // pred_fallthru
        _
    $region16: #{conv1x1_bn_relu.2} parent=5 // pred_fallthru
      _
    %p123 = scmp.le.s32.totalorder 1, %s9
    %p124 = scmp.lt.s32.totalorder %s9, 3
    %p125 = pnand %p123, %p124
    %p126 = pneg %p125
    // Predicated region
    $region21: #{conv1x1_bn_relu.2} parent=5 // pred_check
      _
    $region22: #{conv1x1_bn_relu.2} parent=5 // pred_check_branch
      %128 = sbr.rel (%p125) target = $region24
    $region23: #{conv1x1_bn_relu.2} parent=5 // pred_region
      %s129 = ssub.s32 %s9, 1
      %s130 = smul.u32 2, %s19
      %p131 = scmp.lt.s32.totalorder %s18, 1
      %s132 = scalar_select %p131, %s18, 1
      %p133 = scmp.lt.s32.totalorder %s130, 1
      %s134 = scalar_select %p133, %s130, 1
      %s135 = smul.addr %s132, 2
      %s136 = sadd.s32 %s134, %s135
      %s137 = smul.addr %s136, 4
      %s138 = scalar_lea.vmem %s0, %s137
      %p139 = pneg %p49
      %p140 = pneg %p46
      %p141 = pneg %p70
      %p142 = pneg %p67
      %p143 = pneg %p91
      %p144 = pneg %p88
      %s145 = smul.u32 2, %s19
      %p146 = scmp.lt.s32.totalorder %s18, 1
      %s147 = scalar_select %p146, %s18, 1
      %p148 = scmp.lt.s32.totalorder %s145, 1
      %s149 = scalar_select %p148, %s145, 1
      %s150 = smul.addr %s147, 2
      %s151 = sadd.s32 %s149, %s150
      %s152 = smul.addr %s151, 4
      %s153 = scalar_lea.vmem %s0, %s152
      %s154 = smul.u32 2, %s19
      %p155 = scmp.eq.s32.totalorder %s18, 0
      %p156 = scmp.eq.s32.totalorder %s19, 0
      %p157 = pnand %p155, %p156
      %p158 = pneg %p157
      // Predicated region
      $region25: #{conv1x1_bn_relu.2} parent=23 // pred_check
        _
      $region26: #{conv1x1_bn_relu.2} parent=23 // pred_check_branch
        %160 = sbr.rel (%p157) target = $region28
      $region27: #{conv1x1_bn_relu.2} parent=23 // pred_region
        %vm161 = vcmask 3072
        %162 = vst.msk [vmem:[%s1] sm:$0xf] %vm161, 0.0
        %vm163 = vcmask 27648
        %164 = vst.msk [vmem:[%s2] sm:$0xf] %vm163, 0.0
      $region28: #{conv1x1_bn_relu.2} parent=23 // pred_fallthru
        _
      %v165 = vld [vmem:[%s153] sm:$0xff]
      %v166 = vld [vmem:[%s1] sm:$0xf]
      %168 = vst [vmem:[#allocation1] ss:$2 sm:$0xff] %v165
      %v169 = vld.sshfl [vmem:[#allocation1] sm:$0xff pattern:$0x75316420]
      %v170 = vld.sshfl [vmem:[#allocation1 + $0x8] sm:$0xff pattern:$0x75316420]
      %vm173 = vcmask 1043456
      %v174 = vsel %vm173, %v169, 0.0
      %v175 = vsel %vm173, %v170, 0.0
      %v176 = vadd.f32 %v174, %v175
      %177 = vadd.xlane.f32.xlu0 %v176
      %v178 = vpop.xlane.xlu0 %177
      %v179 = vadd.f32 %v166, %v178
      %vm180 = vcmask 3072
      %181 = vst.msk [vmem:[%s1] sm:$0xf] %vm180, %v179
      %v182 = vld [vmem:[%s2] sm:$0xf]
      %183 = vst [vmem:[#allocation1] ss:$2 sm:$0xff] %v165
      %v184 = vld.sshfl [vmem:[#allocation1] sm:$0xff pattern:$0x75316420]
      %v185 = vld.sshfl [vmem:[#allocation1 + $0x8] sm:$0xff pattern:$0x75316420]
      %188 = vst [vmem:[#allocation1] ss:$2 sm:$0xff] %v165
      %v189 = vld.sshfl [vmem:[#allocation1] sm:$0xff pattern:$0x75316420]
      %v190 = vld.sshfl [vmem:[#allocation1 + $0x8] sm:$0xff pattern:$0x75316420]
      %193 = vmatpush.xpose.msra.mxu0 0.0
      %194 = vmatpush.xpose.msra.mxu0 0.0
      %195 = vmatpush.xpose.msra.mxu0 0.0
      %196 = vmatpush.xpose.msra.mxu0 0.0
      %197 = vmatpush.xpose.msra.mxu0 0.0
      %198 = vmatpush.xpose.msra.mxu0 0.0
      %199 = vmatpush.xpose.msra.mxu0 0.0
      %200 = vmatpush.xpose.msra.mxu0 0.0
      %201 = vmatpush.xpose.msra.mxu0 0.0
      %202 = vmatpush.xpose.msra.mxu0 0.0
      %203 = vmatpush.xpose.msra.mxu0 0.0
      %204 = vmatpush.xpose.msra.mxu0 0.0
      %205 = vmatpush.xpose.msra.mxu0 0.0
      %206 = vmatpush.xpose.msra.mxu0 0.0
      %207 = vmatpush.xpose.msra.mxu0 0.0
      %208 = vmatpush.xpose.msra.mxu0 %v189
      %209 = vmatmul.f32.gmra.mxu0 %v184
      %v210 = vpop.f32.mrf.mxu0
      %v211 = vadd.f32 0.0, %v210
      %212 = vdwg.mxu0
      %213 = vmatpush.xpose.msra.mxu0 0.0
      %214 = vmatpush.xpose.msra.mxu0 0.0
      %215 = vmatpush.xpose.msra.mxu0 0.0
      %216 = vmatpush.xpose.msra.mxu0 0.0
      %217 = vmatpush.xpose.msra.mxu0 0.0
      %218 = vmatpush.xpose.msra.mxu0 0.0
      %219 = vmatpush.xpose.msra.mxu0 0.0
      %220 = vmatpush.xpose.msra.mxu0 0.0
      %221 = vmatpush.xpose.msra.mxu0 0.0
      %222 = vmatpush.xpose.msra.mxu0 0.0
      %223 = vmatpush.xpose.msra.mxu0 0.0
      %224 = vmatpush.xpose.msra.mxu0 0.0
      %225 = vmatpush.xpose.msra.mxu0 0.0
      %226 = vmatpush.xpose.msra.mxu0 0.0
      %227 = vmatpush.xpose.msra.mxu0 0.0
      %228 = vmatpush.xpose.msra.mxu0 %v190
      %229 = vmatmul.f32.gmra.mxu0 %v185
      %v230 = vpop.f32.mrf.mxu0
      %v231 = vadd.f32 %v211, %v230
      %232 = vdwg.mxu0
      %v233 = vadd.f32 %v182, %v231
      %vm234 = vcmask 27648
      %235 = vst.msk [vmem:[%s2] sm:$0xf] %vm234, %v233
      // Predicated region
      $region29: #{conv1x1_bn_relu.2} parent=23 // pred_check
        %p236 = pneg %p67
      $region30: #{conv1x1_bn_relu.2} parent=23 // pred_check_branch
        %238 = sbr.rel (%p236) target = $region32
      $region31: #{conv1x1_bn_relu.2} parent=23 // pred_region
        _
      $region32: #{conv1x1_bn_relu.2} parent=23 // pred_fallthru
        _
      // Predicated region
      $region33: #{conv1x1_bn_relu.2} parent=23 // pred_check
        %p239 = pneg %p88
      $region34: #{conv1x1_bn_relu.2} parent=23 // pred_check_branch
        %241 = sbr.rel (%p239) target = $region36
      $region35: #{conv1x1_bn_relu.2} parent=23 // pred_region
        _
      $region36: #{conv1x1_bn_relu.2} parent=23 // pred_fallthru
        _
      // Predicated region
      $region37: #{conv1x1_bn_relu.2} parent=23 // pred_check
        %p242 = pneg %p67
      $region38: #{conv1x1_bn_relu.2} parent=23 // pred_check_branch
        %244 = sbr.rel (%p242) target = $region40
      $region39: #{conv1x1_bn_relu.2} parent=23 // pred_region
        _
      $region40: #{conv1x1_bn_relu.2} parent=23 // pred_fallthru
        _
      // Predicated region
      $region41: #{conv1x1_bn_relu.2} parent=23 // pred_check
        %p245 = pneg %p88
      $region42: #{conv1x1_bn_relu.2} parent=23 // pred_check_branch
        %247 = sbr.rel (%p245) target = $region44
      $region43: #{conv1x1_bn_relu.2} parent=23 // pred_region
        _
      $region44: #{conv1x1_bn_relu.2} parent=23 // pred_fallthru
        _
    $region24: #{conv1x1_bn_relu.2} parent=5 // pred_fallthru
      _
    %p248 = scmp.le.s32.totalorder 2, %s9
    // Predicated region
    $region45: #{conv1x1_bn_relu.2} parent=5 // pred_check
      %p249 = pneg %p248
    $region46: #{conv1x1_bn_relu.2} parent=5 // pred_check_branch
      %251 = sbr.rel (%p249) target = $region48
    $region47: #{conv1x1_bn_relu.2} parent=5 // pred_region
      %s252 = ssub.s32 %s9, 2
    $region48: #{conv1x1_bn_relu.2} parent=5 // pred_fallthru
      _
  $region6: #{conv1x1_bn_relu.2} parent=0 // loop_footer
    %s13 = sadd.s32 1, %s9
  $region7: #{conv1x1_bn_relu.2} parent=0 // loop_footer_branch
    %8 = sbr.rel target = $region3
  $region8: #{conv1x1_bn_relu.2} parent=0 // loop_exit
    _

// kernel: conv1x1_bn_relu.3
$region0: #{conv1x1_bn_relu.3}
  #allocation0 [shape = 'u32[]', space=smem, size = 0x4, offset = 0x4, fixed_abs, tag = 'smem constant byte address 0x4 - core index']
  #allocation1 [shape = 'u32[72,128]{1,0:T(1,128)}', space=vmem, size = 0x9000, scoped, tag = 'internal scratch']
  %s0 = inlined_call_operand.vmem [shape: f32[2,4,256], index: 0, kind: input, shape index: {}]
  %s1 = inlined_call_operand.vmem [shape: f32[8,4], index: 1, kind: input, shape index: {}]
  %s2 = inlined_call_operand.vmem [shape: f32[8,1], index: 2, kind: input, shape index: {}]
  %s3 = inlined_call_operand.vmem [shape: f32[2,8,256], index: 3, kind: output, shape index: {}]
  %s4 = sld [smem:[#allocation0]]
  $region45: #{conv1x1_bn_relu.3} parent=0
    _
  %s6 = ssub.s32 1, %s4
  %s7 = scalar_select 0, %s6, %s4
  loop: start=0, step=1, limit=4
  $region2: #{conv1x1_bn_relu.3} parent=0 // loop_pre_header
    _
  $region3: #{conv1x1_bn_relu.3} parent=0 // loop_header
    %s9 = sphi 0, %s13
    %p10 = scmp.ge.s32.totalorder %s9, 4
    %s16 = sphi 0, %s28
    %s17 = sphi 0, %s24
    %s18 = sphi 0, %s16
    %s19 = sphi 0, %s17
    %s20 = sphi 0, %s18
    %s21 = sphi 0, %s19
    %s33 = sphi 0, %s35
    %s36 = sphi 0, %s33
    %s37 = sphi 0, %s36
    %s53 = sphi 0, %s37
    %s57 = sphi 0, %s57
    %s59 = sphi 0, %s57
    %s60 = sphi 0, %s59
    %s74 = sphi 0, %s60
    %s78 = sphi 0, %s78
    %s80 = sphi 0, %s78
    %s81 = sphi 0, %s80
    %s95 = sphi 0, %s81
    %s103 = sphi 0, %s105
    %s106 = sphi 0, %s103
    %s107 = sphi 0, %s106
    %s123 = sphi 0, %s107
  $region4: #{conv1x1_bn_relu.3} parent=0 // loop_header_branch
    %12 = sbr.rel (%p10) target = $region8
  $region5: #{conv1x1_bn_relu.3} parent=0 // loop_body
    %s14 = ssub.s32 %s9, 1
    %s15 = ssub.s32 %s9, 2
    %s22 = sadd.s32 1, %s17
    %p23 = scmp.ge.s32.totalorder %s22, 1
    %s24 = scalar_select %p23, 0, %s22
    %s25 = sadd.s32 1, %s16
    %s26 = scalar_select %p23, %s25, %s16
    %p27 = scmp.ge.s32.totalorder %s26, 2
    %s28 = scalar_select %p27, 0, %s26
    %s29 = ssub.s32 %s16, %s28
    %s30 = ssub.s32 %s17, %s24
    %s31 = sor.u32 %s29, %s30
    %p32 = scmp.eq.s32.totalorder %s31, 0
    %s34 = sadd.s32 %s33, 1
    %s35 = scalar_select %p32, %s33, %s34
    %p38 = pneg %p32
    %p39 = scmp.eq.s32.totalorder %s9, 1
    %p40 = por %p38, %p39
    %p41 = scmp.ne.s32.totalorder %s33, %s36
    %p42 = scmp.eq.s32.totalorder %s9, 0
    %p43 = por %p41, %p42
    %p44 = scmp.ne.s32.totalorder %s33, %s36
    %p45 = scmp.eq.s32.totalorder %s14, 1
    %p46 = por %p44, %p45
    %p47 = scmp.ne.s32.totalorder %s36, %s37
    %p48 = scmp.eq.s32.totalorder %s14, 0
    %p49 = por %p47, %p48
    %p50 = scmp.ne.s32.totalorder %s36, %s37
    %p51 = scmp.eq.s32.totalorder %s15, 1
    %p52 = por %p50, %p51
    %p54 = scmp.ne.s32.totalorder %s37, %s53
    %p55 = scmp.eq.s32.totalorder %s15, 0
    %p56 = por %p54, %p55
    %s58 = sadd.s32 %s57, 1
    %p61 = scmp.eq.s32.totalorder %s9, 1
    %p62 = scmp.ne.s32.totalorder %s57, %s59
    %p63 = scmp.eq.s32.totalorder %s9, 0
    %p64 = por %p62, %p63
    %p65 = scmp.ne.s32.totalorder %s57, %s59
    %p66 = scmp.eq.s32.totalorder %s14, 1
    %p67 = por %p65, %p66
    %p68 = scmp.ne.s32.totalorder %s59, %s60
    %p69 = scmp.eq.s32.totalorder %s14, 0
    %p70 = por %p68, %p69
    %p71 = scmp.ne.s32.totalorder %s59, %s60
    %p72 = scmp.eq.s32.totalorder %s15, 1
    %p73 = por %p71, %p72
    %p75 = scmp.ne.s32.totalorder %s60, %s74
    %p76 = scmp.eq.s32.totalorder %s15, 0
    %p77 = por %p75, %p76
    %s79 = sadd.s32 %s78, 1
    %p82 = scmp.eq.s32.totalorder %s9, 1
    %p83 = scmp.ne.s32.totalorder %s78, %s80
    %p84 = scmp.eq.s32.totalorder %s9, 0
    %p85 = por %p83, %p84
    %p86 = scmp.ne.s32.totalorder %s78, %s80
    %p87 = scmp.eq.s32.totalorder %s14, 1
    %p88 = por %p86, %p87
    %p89 = scmp.ne.s32.totalorder %s80, %s81
    %p90 = scmp.eq.s32.totalorder %s14, 0
    %p91 = por %p89, %p90
    %p92 = scmp.ne.s32.totalorder %s80, %s81
    %p93 = scmp.eq.s32.totalorder %s15, 1
    %p94 = por %p92, %p93
    %p96 = scmp.ne.s32.totalorder %s81, %s95
    %p97 = scmp.eq.s32.totalorder %s15, 0
    %p98 = por %p96, %p97
    %s99 = ssub.s32 %s16, %s28
    %s100 = ssub.s32 %s17, %s24
    %s101 = sor.u32 %s99, %s100
    %p102 = scmp.eq.s32.totalorder %s101, 0
    %s104 = sadd.s32 %s103, 1
    %s105 = scalar_select %p102, %s103, %s104
    %p108 = pneg %p102
    %p109 = scmp.eq.s32.totalorder %s9, 1
    %p110 = por %p108, %p109
    %p111 = scmp.ne.s32.totalorder %s103, %s106
    %p112 = scmp.eq.s32.totalorder %s9, 0
    %p113 = por %p111, %p112
    %p114 = scmp.ne.s32.totalorder %s103, %s106
    %p115 = scmp.eq.s32.totalorder %s14, 1
    %p116 = por %p114, %p115
    %p117 = scmp.ne.s32.totalorder %s106, %s107
    %p118 = scmp.eq.s32.totalorder %s14, 0
    %p119 = por %p117, %p118
    %p120 = scmp.ne.s32.totalorder %s106, %s107
    %p121 = scmp.eq.s32.totalorder %s15, 1
    %p122 = por %p120, %p121
    %p124 = scmp.ne.s32.totalorder %s107, %s123
    %p125 = scmp.eq.s32.totalorder %s15, 0
    %p126 = por %p124, %p125
    %p127 = scmp.le.s32.totalorder 1, %s9
    %p128 = scmp.lt.s32.totalorder %s9, 3
    %p129 = pnand %p127, %p128
    %p130 = pneg %p129
    // Predicated region
    $region9: #{conv1x1_bn_relu.3} parent=5 // pred_check
      _
    $region10: #{conv1x1_bn_relu.3} parent=5 // pred_check_branch
      %132 = sbr.rel (%p129) target = $region12
    $region11: #{conv1x1_bn_relu.3} parent=5 // pred_region
      %s133 = ssub.s32 %s9, 1
      // Predicated region
      $region13: #{conv1x1_bn_relu.3} parent=11 // pred_check
        %p134 = pneg %p70
      $region14: #{conv1x1_bn_relu.3} parent=11 // pred_check_branch
        %136 = sbr.rel (%p134) target = $region16
      $region15: #{conv1x1_bn_relu.3} parent=11 // pred_region
        _
      $region16: #{conv1x1_bn_relu.3} parent=11 // pred_fallthru
        _
      // Predicated region
      $region17: #{conv1x1_bn_relu.3} parent=11 // pred_check
        %p137 = pneg %p91
      $region18: #{conv1x1_bn_relu.3} parent=11 // pred_check_branch
        %139 = sbr.rel (%p137) target = $region20
      $region19: #{conv1x1_bn_relu.3} parent=11 // pred_region
        _
      $region20: #{conv1x1_bn_relu.3} parent=11 // pred_fallthru
        _
    $region12: #{conv1x1_bn_relu.3} parent=5 // pred_fallthru
      _
    %p140 = scmp.lt.s32.totalorder %s9, 2
    // Predicated region
    $region21: #{conv1x1_bn_relu.3} parent=5 // pred_check
      %p141 = pneg %p140
    $region22: #{conv1x1_bn_relu.3} parent=5 // pred_check_branch
      %143 = sbr.rel (%p141) target = $region24
    $region23: #{conv1x1_bn_relu.3} parent=5 // pred_region
      // Predicated region
      $region25: #{conv1x1_bn_relu.3} parent=23 // pred_check
        %p144 = pneg %p43
      $region26: #{conv1x1_bn_relu.3} parent=23 // pred_check_branch
        %146 = sbr.rel (%p144) target = $region28
      $region27: #{conv1x1_bn_relu.3} parent=23 // pred_region
        %s147 = smul.u32 2, %s17
        %p148 = scmp.lt.s32.totalorder %s16, 1
        %s149 = scalar_select %p148, %s16, 1
        %p150 = scmp.lt.s32.totalorder %s147, 1
        %s151 = scalar_select %p150, %s147, 1
        %s152 = smul.addr %s149, 2
        %s153 = sadd.s32 %s151, %s152
        %s154 = smul.addr %s153, 4
        %s155 = scalar_lea.vmem %s0, %s154
        %s156 = smul.u32 2, %s17
      $region28: #{conv1x1_bn_relu.3} parent=23 // pred_fallthru
        _
    $region24: #{conv1x1_bn_relu.3} parent=5 // pred_fallthru
      _
    %p157 = scmp.le.s32.totalorder 1, %s9
    %p158 = scmp.lt.s32.totalorder %s9, 3
    %p159 = pnand %p157, %p158
    %p160 = pneg %p159
    // Predicated region
    $region29: #{conv1x1_bn_relu.3} parent=5 // pred_check
      _
    $region30: #{conv1x1_bn_relu.3} parent=5 // pred_check_branch
      %162 = sbr.rel (%p159) target = $region32
    $region31: #{conv1x1_bn_relu.3} parent=5 // pred_region
      %s163 = ssub.s32 %s9, 1
      %s164 = smul.u32 2, %s19
      %p165 = scmp.lt.s32.totalorder %s18, 1
      %s166 = scalar_select %p165, %s18, 1
      %p167 = scmp.lt.s32.totalorder %s164, 1
      %s168 = scalar_select %p167, %s164, 1
      %s169 = smul.addr %s166, 2
      %s170 = sadd.s32 %s168, %s169
      %s171 = smul.addr %s170, 4
      %s172 = scalar_lea.vmem %s0, %s171
      %p173 = pneg %p49
      %p174 = pneg %p46
      %p175 = pneg %p70
      %p176 = pneg %p67
      %p177 = pneg %p91
      %p178 = pneg %p88
      %p179 = pneg %p119
      %p180 = pneg %p116
      %s181 = smul.u32 2, %s19
      %p182 = scmp.lt.s32.totalorder %s18, 1
      %s183 = scalar_select %p182, %s18, 1
      %p184 = scmp.lt.s32.totalorder %s181, 1
      %s185 = scalar_select %p184, %s181, 1
      %s186 = smul.addr %s183, 2
      %s187 = sadd.s32 %s185, %s186
      %s188 = smul.addr %s187, 8
      %s189 = scalar_lea.vmem %s3, %s188
      %s190 = smul.u32 2, %s19
      %p191 = scmp.lt.s32.totalorder %s18, 1
      %s192 = scalar_select %p191, %s18, 1
      %p193 = scmp.lt.s32.totalorder %s190, 1
      %s194 = scalar_select %p193, %s190, 1
      %s195 = smul.addr %s192, 2
      %s196 = sadd.s32 %s194, %s195
      %s197 = smul.addr %s196, 4
      %s198 = scalar_lea.vmem %s0, %s197
      %s199 = smul.u32 2, %s19
      %s200 = smul.u32 2, %s19
      %p201 = scmp.lt.s32.totalorder %s18, 1
      %s202 = scalar_select %p201, %s18, 1
      %p203 = scmp.lt.s32.totalorder %s200, 1
      %s204 = scalar_select %p203, %s200, 1
      %s205 = smul.addr %s202, 2
      %s206 = sadd.s32 %s204, %s205
      %s207 = smul.addr %s206, 8
      %s208 = scalar_lea.vmem %s3, %s207
      %s209 = smul.u32 2, %s19
      %v210 = vld [vmem:[%s1] sm:$0xff]
      %v211 = vld [vmem:[%s198] sm:$0xff]
      %v212 = vld [vmem:[%s2] sm:$0xff]
      %214 = vset.pattern.permute.xlu0 0
      %215 = vperm.xlu0 %214, %v212
      %v216 = vpop.permute.xlu0 %215
      %219 = vst [vmem:[#allocation1] ss:$2 sm:$0xff] %v211
      %v220 = vld.sshfl [vmem:[#allocation1] sm:$0xff pattern:$0x75316420]
      %v221 = vld.sshfl [vmem:[#allocation1 + $0x8] sm:$0xff pattern:$0x75316420]
      %vm222 = vcmask 31744
      %v224 = vsel %vm222, %v210, 0
      %vm226 = vcmask 1043456
      %v227 = vsel %vm226, %v220, 0
      %v229 = vsel %vm226, %v221, 0
      %231 = vmatpush.msra.mxu0 0.0
      %232 = vmatpush.msra.mxu0 0.0
      %233 = vmatpush.msra.mxu0 0.0
      %234 = vmatpush.msra.mxu0 0.0
      %235 = vmatpush.msra.mxu0 0.0
      %236 = vmatpush.msra.mxu0 0.0
      %237 = vmatpush.msra.mxu0 0.0
      %238 = vmatpush.msra.mxu0 0.0
      %239 = vmatpush.msra.mxu0 0.0
      %240 = vmatpush.msra.mxu0 0.0
      %241 = vmatpush.msra.mxu0 0.0
      %242 = vmatpush.msra.mxu0 0.0
      %243 = vmatpush.msra.mxu0 0.0
      %244 = vmatpush.msra.mxu0 0.0
      %245 = vmatpush.msra.mxu0 0.0
      %246 = vmatpush.msra.mxu0 %v227
      %247 = vmatmul.f32.gmra.mxu0 %v224
      %v248 = vpop.f32.mrf.mxu0
      %v249 = vadd.f32 %v216, %v248
      %250 = vdwg.mxu0
      %251 = vmatpush.msra.mxu0 0.0
      %252 = vmatpush.msra.mxu0 0.0
      %253 = vmatpush.msra.mxu0 0.0
      %254 = vmatpush.msra.mxu0 0.0
      %255 = vmatpush.msra.mxu0 0.0
      %256 = vmatpush.msra.mxu0 0.0
      %257 = vmatpush.msra.mxu0 0.0
      %258 = vmatpush.msra.mxu0 0.0
      %259 = vmatpush.msra.mxu0 0.0
      %260 = vmatpush.msra.mxu0 0.0
      %261 = vmatpush.msra.mxu0 0.0
      %262 = vmatpush.msra.mxu0 0.0
      %263 = vmatpush.msra.mxu0 0.0
      %264 = vmatpush.msra.mxu0 0.0
      %265 = vmatpush.msra.mxu0 0.0
      %266 = vmatpush.msra.mxu0 %v229
      %267 = vmatmul.f32.gmra.mxu0 %v224
      %v268 = vpop.f32.mrf.mxu0
      %v269 = vadd.f32 %v216, %v268
      %270 = vdwg.mxu0
      %v271 = vmax.f32 %v249, 0.0
      %v272 = vmax.f32 %v269, 0.0
      %273 = vst [vmem:[%s208] sm:$0xff] %v271
      %274 = vst [vmem:[%s208 + $0x8] sm:$0xff] %v272
      %s275 = smul.u32 2, %s19
      %p276 = scmp.lt.s32.totalorder %s18, 1
      %s277 = scalar_select %p276, %s18, 1
      %p278 = scmp.lt.s32.totalorder %s275, 1
      %s279 = scalar_select %p278, %s275, 1
      %s280 = smul.addr %s277, 2
      %s281 = sadd.s32 %s279, %s280
      %s282 = smul.addr %s281, 8
      %s283 = scalar_lea.vmem %s3, %s282
      // Predicated region
      $region33: #{conv1x1_bn_relu.3} parent=31 // pred_check
        %p284 = pneg %p116
      $region34: #{conv1x1_bn_relu.3} parent=31 // pred_check_branch
        %286 = sbr.rel (%p284) target = $region36
      $region35: #{conv1x1_bn_relu.3} parent=31 // pred_region
        %s287 = smul.u32 2, %s19
      $region36: #{conv1x1_bn_relu.3} parent=31 // pred_fallthru
        _
    $region32: #{conv1x1_bn_relu.3} parent=5 // pred_fallthru
      _
    %p288 = scmp.le.s32.totalorder 2, %s9
    // Predicated region
    $region37: #{conv1x1_bn_relu.3} parent=5 // pred_check
      %p289 = pneg %p288
    $region38: #{conv1x1_bn_relu.3} parent=5 // pred_check_branch
      %291 = sbr.rel (%p289) target = $region40
    $region39: #{conv1x1_bn_relu.3} parent=5 // pred_region
      %s292 = ssub.s32 %s9, 2
      // Predicated region
      $region41: #{conv1x1_bn_relu.3} parent=39 // pred_check
        %p293 = pneg %p122
      $region42: #{conv1x1_bn_relu.3} parent=39 // pred_check_branch
        %295 = sbr.rel (%p293) target = $region44
      $region43: #{conv1x1_bn_relu.3} parent=39 // pred_region
        %s296 = smul.u32 2, %s21
        %p297 = scmp.lt.s32.totalorder %s20, 1
        %s298 = scalar_select %p297, %s20, 1
        %p299 = scmp.lt.s32.totalorder %s296, 1
        %s300 = scalar_select %p299, %s296, 1
        %s301 = smul.addr %s298, 2
        %s302 = sadd.s32 %s300, %s301
        %s303 = smul.addr %s302, 8
        %s304 = scalar_lea.vmem %s3, %s303
      $region44: #{conv1x1_bn_relu.3} parent=39 // pred_fallthru
        _
    $region40: #{conv1x1_bn_relu.3} parent=5 // pred_fallthru
      _
  $region6: #{conv1x1_bn_relu.3} parent=0 // loop_footer
    %s13 = sadd.s32 1, %s9
  $region7: #{conv1x1_bn_relu.3} parent=0 // loop_footer_branch
    %8 = sbr.rel target = $region3
  $region8: #{conv1x1_bn_relu.3} parent=0 // loop_exit
    _

</llo_original>
